<compile_context>
chip_gen: v6e
topology: v6e:2x2x1
jax: 0.10.0
libtpu: 0.0.40
codegen_flags: <defaults>
</compile_context>

<pallas_src>
import functools
import math

import jax
import jax.numpy as jnp
from jax.experimental import pallas as pl
from jax.experimental.pallas import tpu as pltpu


# bf16 matmul operands (f32 MXU accumulation) per perf review; set to
# jnp.float32 for bit-closer f32 semantics.
MATMUL_INPUT_DTYPE = jnp.bfloat16


# -----------------------------------------------------------------------------
# Tiled fused matmul kernels
# -----------------------------------------------------------------------------
def _apply_act(y, act):
  if act == "relu":
    return jnp.maximum(y, 0.0)
  if act == "sigmoid":
    return jax.nn.sigmoid(y)
  return y


def _mm_kernel(a_ref, w_ref, b_ref, o_ref, acc_ref, *, act):
  """o = act(a @ w + bias), K-accumulated in a f32 VMEM scratch."""
  @pl.when(pl.program_id(2) == 0)
  def _init():
    acc_ref[...] = jnp.zeros_like(acc_ref)

  acc_ref[...] += jnp.dot(a_ref[...], w_ref[...],
                          preferred_element_type=jnp.float32)

  @pl.when(pl.program_id(2) == pl.num_programs(2) - 1)
  def _finish():
    o_ref[...] = _apply_act(acc_ref[...] + b_ref[...], act)


def _mm_act_affine_kernel(a_ref, w_ref, b_ref, s_ref, t_ref, o_ref, acc_ref,
                          *, act):
  """o = act(a @ w + bias) * scale + shift   (conv -> act -> BN order)."""
  @pl.when(pl.program_id(2) == 0)
  def _init():
    acc_ref[...] = jnp.zeros_like(acc_ref)

  acc_ref[...] += jnp.dot(a_ref[...], w_ref[...],
                          preferred_element_type=jnp.float32)

  @pl.when(pl.program_id(2) == pl.num_programs(2) - 1)
  def _finish():
    y = _apply_act(acc_ref[...] + b_ref[...], act)
    o_ref[...] = y * s_ref[...] + t_ref[...]


def _round_up(v, m):
  return -(-v // m) * m


def _pad2(x, rows, cols):
  pr, pc = rows - x.shape[0], cols - x.shape[1]
  if pr or pc:
    x = jnp.pad(x, ((0, pr), (0, pc)))
  return x


def fused_matmul(a, w, bias, scale=None, shift=None, act="none",
                 order="affine_act"):
  """act(a @ w + bias) with an optional BatchNorm affine.

  order == "affine_act": the BN affine commutes with the (post-affine)
    activation, so it is folded into (w, bias) at trace time -> plain kernel.
  order == "act_affine": activation first, affine after (kept in the kernel).
  """
  m, k = a.shape
  n = w.shape[1]
  a = a.astype(jnp.float32)
  w = w.astype(jnp.float32)
  bias = bias.astype(jnp.float32)

  if scale is not None and order == "affine_act":
    # y = act((a@w + b)*s + t) == act(a@(w*s) + (b*s + t))  (exact algebra)
    w = w * scale[None, :]
    bias = bias * scale + shift
    scale = shift = None

  # ---- tile selection (K, N are tiny in this model -> keep them whole) ----
  if m <= 512:
    tm = _round_up(m, 8)
    mp = tm
  else:
    tm = 512
    mp = _round_up(m, tm)
  if k <= 1024:
    tk, kp = k, k
  else:
    tk = 512
    kp = _round_up(k, tk)
  if n <= 1024:
    tn, n_pad = n, n
  else:
    tn = 512
    n_pad = _round_up(n, tn)

  a_p = _pad2(a, mp, kp).astype(MATMUL_INPUT_DTYPE)
  w_p = _pad2(w, kp, n_pad).astype(MATMUL_INPUT_DTYPE)
  b_p = _pad2(bias.reshape(1, n), 1, n_pad)

  a_spec = pl.BlockSpec((tm, tk), lambda i, j, kk: (i, kk))
  w_spec = pl.BlockSpec((tk, tn), lambda i, j, kk: (kk, j))
  v_spec = pl.BlockSpec((1, tn), lambda i, j, kk: (0, j))
  o_spec = pl.BlockSpec((tm, tn), lambda i, j, kk: (i, j))

  if scale is None:
    kernel = functools.partial(_mm_kernel, act=act)
    in_specs = [a_spec, w_spec, v_spec]
    args = (a_p, w_p, b_p)
  else:
    s_p = _pad2(scale.reshape(1, n).astype(jnp.float32), 1, n_pad)
    t_p = _pad2(shift.reshape(1, n).astype(jnp.float32), 1, n_pad)
    kernel = functools.partial(_mm_act_affine_kernel, act=act)
    in_specs = [a_spec, w_spec, v_spec, v_spec, v_spec]
    args = (a_p, w_p, b_p, s_p, t_p)

  # Explicit VMEM budget: double-buffered operand blocks + f32 output/acc.
  elt = jnp.dtype(MATMUL_INPUT_DTYPE).itemsize
  vmem_bytes = 2 * (tm * tk * elt + tk * tn * elt + tm * tn * 4)
  vmem_bytes += tm * tn * 4 + 6 * tn * 4
  vmem_limit = int(min(max(2 * vmem_bytes, 8 << 20), 48 << 20))

  out = pl.pallas_call(
      kernel,
      grid=(mp // tm, n_pad // tn, kp // tk),
      in_specs=in_specs,
      out_specs=o_spec,
      out_shape=jax.ShapeDtypeStruct((mp, n_pad), jnp.float32),
      scratch_shapes=[pltpu.VMEM((tm, tn), jnp.float32)],
      compiler_params=pltpu.CompilerParams(
          dimension_semantics=("parallel", "parallel", "arbitrary"),
          vmem_limit_bytes=vmem_limit),
  )(*args)
  if mp != m or n_pad != n:
    out = out[:m, :n]
  return out


# -----------------------------------------------------------------------------
# InstanceNorm1d (tiled over batch)
# -----------------------------------------------------------------------------
def _instnorm_kernel(x_ref, o_ref):
  x = x_ref[...]                                   # (1, n_mels, T)
  mu = jnp.mean(x, axis=-1, keepdims=True)
  var = jnp.mean(jnp.square(x - mu), axis=-1, keepdims=True)
  o_ref[...] = (x - mu) * jax.lax.rsqrt(var + 1e-5)


def instance_norm_1d(x):
  b, c, t = x.shape
  return pl.pallas_call(
      _instnorm_kernel,
      grid=(b,),
      in_specs=[pl.BlockSpec((1, c, t), lambda i: (i, 0, 0))],
      out_specs=pl.BlockSpec((1, c, t), lambda i: (i, 0, 0)),
      out_shape=jax.ShapeDtypeStruct(x.shape, jnp.float32),
      compiler_params=pltpu.CompilerParams(dimension_semantics=("parallel",)),
  )(x)


# -----------------------------------------------------------------------------
# Fused SE tail: global-avg-pool -> FC/relu -> FC/sigmoid -> relu(x*g + res)
# -----------------------------------------------------------------------------
def _se_block_kernel(x_ref, r_ref, w1_ref, b1_ref, w2_ref, b2_ref, o_ref):
  x = x_ref[...]                                   # (1, H, W, C)
  inv_hw = 1.0 / float(x.shape[1] * x.shape[2])
  pooled = jnp.sum(jnp.sum(x, axis=1), axis=1) * inv_hw       # (1, C)
  h = jnp.dot(pooled, w1_ref[...], preferred_element_type=jnp.float32)
  h = jnp.maximum(h + b1_ref[...], 0.0)
  g = jax.nn.sigmoid(
      jnp.dot(h, w2_ref[...], preferred_element_type=jnp.float32)
      + b2_ref[...])                                          # (1, C)
  o_ref[...] = jnp.maximum(x * g[:, None, None, :] + r_ref[...], 0.0)


def se_block(out, residual, w1, b1, w2, b2):
  b, h, w_, c = out.shape
  cr = w1.shape[1]
  return pl.pallas_call(
      _se_block_kernel,
      grid=(b,),
      in_specs=[
          pl.BlockSpec((1, h, w_, c), lambda i: (i, 0, 0, 0)),
          pl.BlockSpec((1, h, w_, c), lambda i: (i, 0, 0, 0)),
          pl.BlockSpec((c, cr), lambda i: (0, 0)),
          pl.BlockSpec((1, cr), lambda i: (0, 0)),
          pl.BlockSpec((cr, c), lambda i: (0, 0)),
          pl.BlockSpec((1, c), lambda i: (0, 0)),
      ],
      out_specs=pl.BlockSpec((1, h, w_, c), lambda i: (i, 0, 0, 0)),
      out_shape=jax.ShapeDtypeStruct(out.shape, jnp.float32),
      compiler_params=pltpu.CompilerParams(dimension_semantics=("parallel",)),
  )(out, residual, w1, b1.reshape(1, cr), w2, b2.reshape(1, c))


# -----------------------------------------------------------------------------
# Fused attention (two 1x1 convs + BN) + softmax over time + SAP pooling
# -----------------------------------------------------------------------------
def _attention_sap_kernel(x_ref, w1t_ref, b1_ref, s1_ref, t1_ref,
                          w2t_ref, b2_ref, o_ref):
  x = x_ref[0]                                                # (CH, T)
  a1 = jnp.dot(w1t_ref[...], x, preferred_element_type=jnp.float32)
  a1 = jnp.maximum(a1 + b1_ref[...], 0.0) * s1_ref[...] + t1_ref[...]
  e = jnp.dot(w2t_ref[...], a1, preferred_element_type=jnp.float32)
  e = e + b2_ref[...]                                         # (CH, T)
  e = e - jnp.max(e, axis=-1, keepdims=True)
  p = jnp.exp(e)
  wts = p / jnp.sum(p, axis=-1, keepdims=True)                # softmax over T
  o_ref[0, :] = jnp.sum(x * wts, axis=-1)                     # SAP


def attention_sap_pool(x, w1, b1, s1, t1, w2, b2):
  b, ch, t = x.shape
  a = w1.shape[1]
  w1t = jnp.transpose(w1)          # (A, CH)
  w2t = jnp.transpose(w2)          # (CH, A)
  return pl.pallas_call(
      _attention_sap_kernel,
      grid=(b,),
      in_specs=[
          pl.BlockSpec((1, ch, t), lambda i: (i, 0, 0)),
          pl.BlockSpec((a, ch), lambda i: (0, 0)),
          pl.BlockSpec((a, 1), lambda i: (0, 0)),
          pl.BlockSpec((a, 1), lambda i: (0, 0)),
          pl.BlockSpec((a, 1), lambda i: (0, 0)),
          pl.BlockSpec((ch, a), lambda i: (0, 0)),
          pl.BlockSpec((ch, 1), lambda i: (0, 0)),
      ],
      out_specs=pl.BlockSpec((1, ch), lambda i: (i, 0)),
      out_shape=jax.ShapeDtypeStruct((b, ch), jnp.float32),
      compiler_params=pltpu.CompilerParams(dimension_semantics=("parallel",)),
  )(x, w1t, b1.reshape(a, 1), s1.reshape(a, 1), t1.reshape(a, 1),
    w2t, b2.reshape(ch, 1))


# -----------------------------------------------------------------------------
# Conv / pooling glue (im2col in plain JAX, GEMM in Pallas)
# -----------------------------------------------------------------------------
def conv2d(x, w, bias=None, scale=None, shift=None, stride=(1, 1), padding=0,
           act="none", order="affine_act"):
  kh, kw, cin, cout = w.shape
  b, h, wd, _ = x.shape
  sh, sw = stride
  if padding:
    x = jnp.pad(x, ((0, 0), (padding, padding), (padding, padding), (0, 0)))
  ho = (h + 2 * padding - kh) // sh + 1
  wo = (wd + 2 * padding - kw) // sw + 1
  if bias is None:
    bias = jnp.zeros((cout,), jnp.float32)
  cols = []
  for i in range(kh):
    for j in range(kw):
      cols.append(x[:, i:i + sh * (ho - 1) + 1:sh, j:j + sw * (wo - 1) + 1:sw, :])
  patches = jnp.concatenate(cols, axis=-1).reshape(b * ho * wo, kh * kw * cin)
  y = fused_matmul(patches, w.reshape(kh * kw * cin, cout), bias, scale, shift,
                   act=act, order=order)
  return y.reshape(b, ho, wo, cout)


def avg_pool_3x3(x, stride):
  """nn.AvgPool2d(3, stride, padding=1), count_include_pad=True."""
  sh, sw = stride
  xp = jnp.pad(x, ((0, 0), (1, 1), (1, 1), (0, 0)))
  h, wd = x.shape[1], x.shape[2]
  ho = (h + 2 - 3) // sh + 1
  wo = (wd + 2 - 3) // sw + 1
  acc = jnp.zeros((x.shape[0], ho, wo, x.shape[3]), jnp.float32)
  for i in range(3):
    for j in range(3):
      acc = acc + xp[:, i:i + sh * (ho - 1) + 1:sh, j:j + sw * (wo - 1) + 1:sw, :]
  return acc / 9.0


# -----------------------------------------------------------------------------
# Audio frontend (PreEmphasis + MelSpectrogram + log + InstanceNorm), plain JAX
# -----------------------------------------------------------------------------
def preemphasis(x, coef=0.97):
  prev = jnp.concatenate([x[:, 1:2], x[:, :-1]], axis=1)   # reflect pad left 1
  return x - coef * prev


def _hamming_periodic(win_length):
  n = jnp.arange(win_length, dtype=jnp.float32)
  return 0.54 - 0.46 * jnp.cos(2.0 * jnp.pi * n / win_length)


def _mel_filterbank(n_freqs, n_mels, f_min, f_max, sample_rate):
  def hz_to_mel(f):
    return 2595.0 * jnp.log10(1.0 + f / 700.0)

  def mel_to_hz(m):
    return 700.0 * (jnp.power(10.0, m / 2595.0) - 1.0)

  all_freqs = jnp.linspace(0.0, sample_rate / 2.0, n_freqs)
  m_pts = jnp.linspace(hz_to_mel(f_min), hz_to_mel(f_max), n_mels + 2)
  f_pts = mel_to_hz(m_pts)
  f_diff = f_pts[1:] - f_pts[:-1]
  slopes = f_pts[None, :] - all_freqs[:, None]
  down = -slopes[:, :-2] / f_diff[:-1]
  up = slopes[:, 2:] / f_diff[1:]
  return jnp.maximum(0.0, jnp.minimum(down, up))            # (n_freqs, n_mels)


def mel_spectrogram(x, n_mels, n_fft=512, win_length=400, hop=160,
                    sample_rate=16000.0):
  pad = n_fft // 2
  xp = jnp.pad(x, ((0, 0), (pad, pad)), mode="reflect")
  n_frames = 1 + (xp.shape[1] - n_fft) // hop
  idx = jnp.arange(n_fft)[None, :] + hop * jnp.arange(n_frames)[:, None]
  frames = xp[:, idx]                                        # (B, F, n_fft)
  wpad = (n_fft - win_length) // 2
  win = jnp.pad(_hamming_periodic(win_length), (wpad, wpad))
  spec = jnp.abs(jnp.fft.rfft(frames * win[None, None, :], axis=-1)) ** 2
  fb = _mel_filterbank(n_fft // 2 + 1, n_mels, 0.0, sample_rate / 2.0,
                       sample_rate)
  return jnp.einsum("bfk,km->bmf", spec, fb)                 # (B, n_mels, F)


# -----------------------------------------------------------------------------
# Parameter initialization (deterministic, synthetic)
# -----------------------------------------------------------------------------
def _bn_fold(c, eps=1e-5):
  # eval-mode BN right after init: gamma=1, beta=0, running_mean=0, running_var=1
  scale = jnp.full((c,), 1.0 / math.sqrt(1.0 + eps), jnp.float32)
  shift = jnp.zeros((c,), jnp.float32)
  return scale, shift


def _kaiming_conv(key, kh, kw, cin, cout):
  std = math.sqrt(2.0 / (cout * kh * kw))                    # fan_out, relu
  return std * jax.random.normal(key, (kh, kw, cin, cout), jnp.float32)


def _dense(key, cin, cout):
  k1, k2 = jax.random.split(key)
  bound = 1.0 / math.sqrt(cin)
  w = jax.random.uniform(k1, (cin, cout), jnp.float32, -bound, bound)
  b = jax.random.uniform(k2, (cout,), jnp.float32, -bound, bound)
  return w, b


def _make_block_params(key_it, inplanes, planes, stride, stype, base_width, scale):
  width = int(math.floor(planes * base_width / 64.0))
  p = {"width": width, "stride": stride, "stype": stype, "scale": scale}
  p["conv1_w"] = _kaiming_conv(next(key_it), 1, 1, inplanes, width * scale)
  p["bn1"] = _bn_fold(width * scale)
  p["convs_w"] = [_kaiming_conv(next(key_it), 3, 3, width, width)
                  for _ in range(scale - 1)]
  p["bns"] = [_bn_fold(width) for _ in range(scale - 1)]
  p["conv3_w"] = _kaiming_conv(next(key_it), 1, 1, width * scale, planes)
  p["bn3"] = _bn_fold(planes)
  cr = max(planes // 4, 1)                                   # SE reduction
  p["se_w1"], p["se_b1"] = _dense(next(key_it), planes, cr)
  p["se_w2"], p["se_b2"] = _dense(next(key_it), cr, planes)
  if stride != (1, 1) or inplanes != planes:                 # expansion == 1
    p["ds_w"] = _kaiming_conv(next(key_it), 1, 1, inplanes, planes)
    p["ds_bn"] = _bn_fold(planes)
  return p


def init_params(key, num_filters, layers, n_mels, n_out, attention_dim,
                base_width=32, scale=4):
  key_it = iter(jax.random.split(key, 256))
  params = {}
  params["conv1_w"] = _kaiming_conv(next(key_it), 3, 3, 1, num_filters[0])
  bnd = 1.0 / math.sqrt(9.0)
  params["conv1_b"] = jax.random.uniform(next(key_it), (num_filters[0],),
                                         jnp.float32, -bnd, bnd)
  params["bn1"] = _bn_fold(num_filters[0])

  inplanes = num_filters[0]
  strides = [(1, 1), (2, 2), (2, 2), (2, 2)]
  params["layers"] = []
  for li in range(4):
    planes = num_filters[li]
    blocks = []
    for bi in range(layers[li]):
      stype = "stage" if bi == 0 else "normal"
      stride = strides[li] if bi == 0 else (1, 1)
      blocks.append(_make_block_params(key_it, inplanes, planes, stride, stype,
                                       base_width, scale))
      inplanes = planes
    params["layers"].append(blocks)

  c_att = num_filters[3] * (n_mels // 8)
  params["att_w1"], params["att_b1"] = _dense(next(key_it), c_att, attention_dim)
  params["att_bn"] = _bn_fold(attention_dim)
  params["att_w2"], params["att_b2"] = _dense(next(key_it), attention_dim, c_att)
  params["fc_w"], params["fc_b"] = _dense(next(key_it), c_att, n_out)
  return params


# -----------------------------------------------------------------------------
# Forward pass
# -----------------------------------------------------------------------------
def _block_forward(x, p):
  scale = p["scale"]
  stride, stype = p["stride"], p["stype"]

  # conv1 1x1 -> BN -> relu   (BN folded into the GEMM weights)
  out = conv2d(x, p["conv1_w"], None, *p["bn1"],
               stride=(1, 1), padding=0, act="relu", order="affine_act")
  spx = jnp.split(out, scale, axis=-1)
  feats = []
  sp = None
  for i in range(scale - 1):
    sp = spx[i] if (i == 0 or stype == "stage") else sp + spx[i]
    sp = conv2d(sp, p["convs_w"][i], None, *p["bns"][i],
                stride=stride, padding=1, act="relu", order="affine_act")
    feats.append(sp)
  feats.append(avg_pool_3x3(spx[scale - 1], stride) if stype == "stage"
               else spx[scale - 1])
  out = jnp.concatenate(feats, axis=-1)

  out = conv2d(out, p["conv3_w"], None, *p["bn3"],
               stride=(1, 1), padding=0, act="none", order="affine_act")

  if "ds_w" in p:
    residual = conv2d(x, p["ds_w"], None, *p["ds_bn"],
                      stride=stride, padding=0, act="none", order="affine_act")
  else:
    residual = x

  # Fused SE tail (pool + FCs + gate + residual + relu) in one Pallas call.
  return se_block(out, residual, p["se_w1"], p["se_b1"], p["se_w2"], p["se_b2"])


def res2net_se_forward(params, wav, n_mels, log_input=True):
  # ---- frontend: PreEmphasis + MelSpectrogram (+1e-6, log, InstanceNorm1d) ----
  mel = mel_spectrogram(preemphasis(wav), n_mels) + 1e-6     # (B, n_mels, T)
  if log_input:
    mel = jnp.log(mel)
  feat = instance_norm_1d(mel)                               # Pallas kernel
  feat = feat[:, :, :, None]                                 # NHWC (B, mel, T, 1)

  # conv1 -> relu -> bn1  (affine after activation -> kept in kernel epilogue)
  h = conv2d(feat, params["conv1_w"], params["conv1_b"], *params["bn1"],
             stride=(1, 1), padding=1, act="relu", order="act_affine")

  # layer1..layer4 (Res2Net SE blocks)
  for blocks in params["layers"]:
    for blk in blocks:
      h = _block_forward(h, blk)

  # (B, H, T, C) -> (B, C*H, T), matches torch x.reshape(B, -1, T) from NCHW
  b, hh, tt, cc = h.shape
  hmap = jnp.transpose(h, (0, 3, 1, 2)).reshape(b, cc * hh, tt)

  # attention (Conv1d k=1 -> ReLU -> BN -> Conv1d k=1 -> Softmax) + SAP pooling
  s1, t1 = params["att_bn"]
  pooled = attention_sap_pool(hmap, params["att_w1"], params["att_b1"],
                              s1, t1, params["att_w2"], params["att_b2"])

  # final Linear
  out = fused_matmul(pooled, params["fc_w"], params["fc_b"], act="none")
  return out


# -----------------------------------------------------------------------------
if __name__ == "__main__":
  # Small config consistent with Res2NetSE(block, layers=[1,1,1,1],
  #   num_filters=[8,8,16,16], nOut=32, encoder_type='SAP', attention_dim=16,
  #   baseWidth=32, scale=4, n_mels=16, log_input=True)
  num_filters = [8, 8, 16, 16]
  layers = [1, 1, 1, 1]
  n_mels = 16
  n_out = 32
  attention_dim = 16

  key = jax.random.PRNGKey(0)
  k_params, k_wav = jax.random.split(key)
  params = init_params(k_params, num_filters, layers, n_mels, n_out,
                       attention_dim, base_width=32, scale=4)
  wav = jax.random.normal(k_wav, (2, 3200), jnp.float32)     # raw audio (B, samples)

  out = res2net_se_forward(params, wav, n_mels=n_mels, log_input=True)
  out = jax.block_until_ready(out)
  assert out.shape == (2, n_out), out.shape
  assert bool(jnp.all(jnp.isfinite(out)))
  print("KERNEL_OK")
</pallas_src>

<mosaic_0001>
module attributes {stable_mosaic.version = 11 : i64} {
  func.func @_instnorm_kernel(%arg0: i32, %arg1: memref<1x16x21xf32, #tpu.memory_space<vmem>>, %arg2: memref<1x16x21xf32, #tpu.memory_space<vmem>>) attributes {dimension_semantics = [#tpu.dimension_semantics<parallel>], iteration_bounds = array<i64: 2>, scalar_prefetch = 0 : i64, scratch_operands = 0 : i64, tpu.core_type = #tpu.core_type<tc>, window_params = [{transform_indices = @transform_0, window_bounds = array<i64: 1, 16, 21>}, {transform_indices = @transform_1, window_bounds = array<i64: 1, 16, 21>}]} {
    %c0 = arith.constant 0 : index
    %c0_0 = arith.constant 0 : index
    %c0_1 = arith.constant 0 : index
    %0 = vector.load %arg1[%c0, %c0_0, %c0_1] : memref<1x16x21xf32, #tpu.memory_space<vmem>>, vector<1x16x21xf32>
    %cst = arith.constant dense<0.000000e+00> : vector<1x16xf32>
    %1 = vector.multi_reduction <add>, %0, %cst [2] : vector<1x16x21xf32> to vector<1x16xf32>
    %2 = vector.shape_cast %1 : vector<1x16xf32> to vector<1x16x1xf32>
    %cst_2 = arith.constant 2.100000e+01 : f32
    %3 = vector.broadcast %cst_2 : f32 to vector<1x16x1xf32>
    %4 = arith.divf %2, %3 : vector<1x16x1xf32>
    %5 = vector.broadcast %4 : vector<1x16x1xf32> to vector<1x16x21xf32>
    %6 = arith.subf %0, %5 : vector<1x16x21xf32>
    %7 = arith.mulf %6, %6 : vector<1x16x21xf32>
    %cst_3 = arith.constant dense<0.000000e+00> : vector<1x16xf32>
    %8 = vector.multi_reduction <add>, %7, %cst_3 [2] : vector<1x16x21xf32> to vector<1x16xf32>
    %9 = vector.shape_cast %8 : vector<1x16xf32> to vector<1x16x1xf32>
    %cst_4 = arith.constant 2.100000e+01 : f32
    %10 = vector.broadcast %cst_4 : f32 to vector<1x16x1xf32>
    %11 = arith.divf %9, %10 : vector<1x16x1xf32>
    %12 = vector.broadcast %4 : vector<1x16x1xf32> to vector<1x16x21xf32>
    %13 = arith.subf %0, %12 : vector<1x16x21xf32>
    %cst_5 = arith.constant 9.99999974E-6 : f32
    %14 = vector.broadcast %cst_5 : f32 to vector<1x16x1xf32>
    %15 = arith.addf %11, %14 : vector<1x16x1xf32>
    %16 = math.rsqrt %15 : vector<1x16x1xf32>
    %17 = vector.broadcast %16 : vector<1x16x1xf32> to vector<1x16x21xf32>
    %18 = arith.mulf %13, %17 : vector<1x16x21xf32>
    %c0_6 = arith.constant 0 : index
    %c0_7 = arith.constant 0 : index
    %c0_8 = arith.constant 0 : index
    %19 = vector.load %arg2[%c0_6, %c0_7, %c0_8] : memref<1x16x21xf32, #tpu.memory_space<vmem>>, vector<1x16x21xf32>
    tpu.vector_store %arg2[%c0_6, %c0_7, %c0_8], %18 {strides = array<i32>} : memref<1x16x21xf32, #tpu.memory_space<vmem>>, vector<1x16x21xf32>,
    return
  }
  func.func @transform_0(%arg0: i32) -> (i32, i32, i32) {
    %c0_i32 = arith.constant 0 : i32
    %c0_i32_0 = arith.constant 0 : i32
    %c0_i32_1 = arith.constant 0 : i32
    return %arg0, %c0_i32, %c0_i32_0 : i32, i32, i32
  }
  func.func @transform_1(%arg0: i32) -> (i32, i32, i32) {
    %c0_i32 = arith.constant 0 : i32
    %c0_i32_0 = arith.constant 0 : i32
    %c0_i32_1 = arith.constant 0 : i32
    return %arg0, %c0_i32, %c0_i32_0 : i32, i32, i32
  }
}

</mosaic_0001>

<llo_original>
// kernel: tpu_custom_call.1
$region0: #{tpu_custom_call.1}
  #allocation0 [shape = 'u32[]', space=smem, size = 0x4, offset = 0x4, fixed_abs, tag = 'smem constant byte address 0x4 - core index']
  #allocation1 [shape = 'u32[144,128]{1,0:T(1,128)}', space=vmem, size = 0x12000, scoped, tag = 'internal scratch']
  %s0 = inlined_call_operand.hbm [shape: f32[2,16,21], index: 0, kind: input, shape index: {}]
  %s1 = inlined_call_operand.hbm [shape: f32[2,16,21], index: 1, kind: output, shape index: {}]
  %s2 = sld [smem:[#allocation0]]
  $region41: #{tpu_custom_call.1} parent=0
    _
  %s4 = ssub.s32 1, %s2
  %s5 = scalar_select 0, %s4, %s2
  $region1: #{tpu_custom_call.1} parent=0
    #allocation2 [shape = 'u8[16384]{0}', space=vmem, size = 0x4000, scoped, tag = 'input window, operand 0']
    #allocation3 [shape = 's32[2]{0}', space=sflag, size = 0x8, scoped, tag = 'scoped memory for tpu_custom_call.1']
    #allocation4 [shape = 's32[2]{0}', space=sflag, size = 0x8, scoped, tag = 'scoped memory for tpu_custom_call.1']
    #allocation5 [shape = 'u8[16384]{0}', space=vmem, size = 0x4000, scoped, tag = 'output window, operand 0']
    %6 = vsyncpa [#allocation3], 0
    %s7 = scalar_lea.sflag [#allocation3], 1
    %8 = vsyncpa %s7, 0
    %9 = vsyncpa [#allocation4], 0
    %s10 = scalar_lea.sflag [#allocation4], 1
    %11 = vsyncpa %s10, 0
    loop: start=0, step=1, limit=4
    $region2: #{tpu_custom_call.1} parent=1 // loop_pre_header
      _
    $region3: #{tpu_custom_call.1} parent=1 // loop_header
      %s13 = sphi 0, %s17
      %p14 = scmp.ge.s32.totalorder %s13, 4
      %s23 = sphi 0, %s25
      %s26 = sphi 0, %s23
      %s27 = sphi 0, %s26
      %s43 = sphi 0, %s27
      %s49 = sphi 0, %s51
      %s52 = sphi 0, %s49
      %s53 = sphi 0, %s52
      %s69 = sphi 0, %s53
    $region4: #{tpu_custom_call.1} parent=1 // loop_header_branch
      %16 = sbr.rel (%p14) target = $region8
    $region5: #{tpu_custom_call.1} parent=1 // loop_body
      %s18 = ssub.s32 %s13, 1
      %s19 = ssub.s32 %s13, 2
      %s20 = sadd.s32 %s13, 1
      %s21 = ssub.s32 %s13, %s20
      %p22 = scmp.eq.s32.totalorder %s21, 0
      %s24 = sadd.s32 %s23, 1
      %s25 = scalar_select %p22, %s23, %s24
      %p28 = pneg %p22
      %p29 = scmp.eq.s32.totalorder %s13, 1
      %p30 = por %p28, %p29
      %p31 = scmp.ne.s32.totalorder %s23, %s26
      %p32 = scmp.eq.s32.totalorder %s13, 0
      %p33 = por %p31, %p32
      %p34 = scmp.ne.s32.totalorder %s23, %s26
      %p35 = scmp.eq.s32.totalorder %s18, 1
      %p36 = por %p34, %p35
      %p37 = scmp.ne.s32.totalorder %s26, %s27
      %p38 = scmp.eq.s32.totalorder %s18, 0
      %p39 = por %p37, %p38
      %p40 = scmp.ne.s32.totalorder %s26, %s27
      %p41 = scmp.eq.s32.totalorder %s19, 1
      %p42 = por %p40, %p41
      %p44 = scmp.ne.s32.totalorder %s27, %s43
      %p45 = scmp.eq.s32.totalorder %s19, 0
      %p46 = por %p44, %p45
      %s47 = ssub.s32 %s13, %s20
      %p48 = scmp.eq.s32.totalorder %s47, 0
      %s50 = sadd.s32 %s49, 1
      %s51 = scalar_select %p48, %s49, %s50
      %p54 = pneg %p48
      %p55 = scmp.eq.s32.totalorder %s13, 1
      %p56 = por %p54, %p55
      %p57 = scmp.ne.s32.totalorder %s49, %s52
      %p58 = scmp.eq.s32.totalorder %s13, 0
      %p59 = por %p57, %p58
      %p60 = scmp.ne.s32.totalorder %s49, %s52
      %p61 = scmp.eq.s32.totalorder %s18, 1
      %p62 = por %p60, %p61
      %p63 = scmp.ne.s32.totalorder %s52, %s53
      %p64 = scmp.eq.s32.totalorder %s18, 0
      %p65 = por %p63, %p64
      %p66 = scmp.ne.s32.totalorder %s52, %s53
      %p67 = scmp.eq.s32.totalorder %s19, 1
      %p68 = por %p66, %p67
      %p70 = scmp.ne.s32.totalorder %s53, %s69
      %p71 = scmp.eq.s32.totalorder %s19, 0
      %p72 = por %p70, %p71
      %p73 = scmp.le.s32.totalorder 1, %s13
      %p74 = scmp.lt.s32.totalorder %s13, 3
      %p75 = pnand %p73, %p74
      %p76 = pneg %p75
      // Predicated region
      $region9: #{tpu_custom_call.1} parent=5 // pred_check
        _
      $region10: #{tpu_custom_call.1} parent=5 // pred_check_branch
        %78 = sbr.rel (%p75) target = $region12
      $region11: #{tpu_custom_call.1} parent=5 // pred_region
        %s79 = ssub.s32 %s13, 1
      $region12: #{tpu_custom_call.1} parent=5 // pred_fallthru
        _
      %p80 = scmp.lt.s32.totalorder %s13, 2
      // Predicated region
      $region13: #{tpu_custom_call.1} parent=5 // pred_check
        %p81 = pneg %p80
      $region14: #{tpu_custom_call.1} parent=5 // pred_check_branch
        %83 = sbr.rel (%p81) target = $region16
      $region15: #{tpu_custom_call.1} parent=5 // pred_region
        // Predicated region
        $region17: #{tpu_custom_call.1} parent=15 // pred_check
          %p84 = pneg %p33
        $region18: #{tpu_custom_call.1} parent=15 // pred_check_branch
          %86 = sbr.rel (%p84) target = $region20
        $region19: #{tpu_custom_call.1} parent=15 // pred_region
          %s87 = sand.u32 %s23, 1
          %s88 = scalar_lea.sflag [#allocation3], %s87
          %s89 = sand.u32 %s23, 1
          %s90 = smul.addr %s89, 16
          %s91 = scalar_lea.vmem [#allocation2], %s90
          %s93 = ssub.s32 256, 256
          %94 = vsyncadd %s88, %s93
          %s95 = smul.addr %s13, 2
          %s96 = smul.addr %s95, 128
          %s97 = scalar_lea.hbm %s0, %s96
          %s98 = sshll.u32 %s91, 4
          %s99 = int_to_ptr.vmem [resolvable:$true] %s98
          %104 = dma.hbm_to_vmem [thread:$0]  %s97, 256, %s99, %s88, 128, 128, 8
        $region20: #{tpu_custom_call.1} parent=15 // pred_fallthru
          _
      $region16: #{tpu_custom_call.1} parent=5 // pred_fallthru
        _
      %p105 = scmp.le.s32.totalorder 1, %s13
      %p106 = scmp.lt.s32.totalorder %s13, 3
      %p107 = pnand %p105, %p106
      %p108 = pneg %p107
      // Predicated region
      $region21: #{tpu_custom_call.1} parent=5 // pred_check
        _
      $region22: #{tpu_custom_call.1} parent=5 // pred_check_branch
        %110 = sbr.rel (%p107) target = $region24
      $region23: #{tpu_custom_call.1} parent=5 // pred_region
        %s111 = ssub.s32 %s13, 1
        %s112 = sand.u32 %s26, 1
        %s113 = scalar_lea.sflag [#allocation3], %s112
        %s114 = sand.u32 %s26, 1
        %s115 = smul.addr %s114, 16
        %s116 = scalar_lea.vmem [#allocation2], %s115
        // Predicated region
        $region25: #{tpu_custom_call.1} parent=23 // pred_check
          %p117 = pneg %p39
        $region26: #{tpu_custom_call.1} parent=23 // pred_check_branch
          %119 = sbr.rel (%p117) target = $region28
        $region27: #{tpu_custom_call.1} parent=23 // pred_region
          %120 = dma.done %s113, 256
        $region28: #{tpu_custom_call.1} parent=23 // pred_fallthru
          _
        %s121 = sand.u32 %s26, 1
        %s122 = scalar_lea.sflag [#allocation3], %s121
        %s123 = sand.u32 %s26, 1
        %s124 = smul.addr %s123, 16
        %s125 = scalar_lea.vmem [#allocation2], %s124
        %p126 = pneg %p39
        %p127 = pneg %p36
        %p128 = pneg %p65
        %p129 = pneg %p62
        %s130 = sand.u32 %s52, 1
        %s131 = scalar_lea.sflag [#allocation4], %s130
        %s132 = sand.u32 %s52, 1
        %s133 = smul.addr %s132, 16
        %s134 = scalar_lea.vmem [#allocation5], %s133
        %v135 = vld [vmem:[%s116] sm:$0xff]
        %v136 = vld [vmem:[%s116 + $0x8] sm:$0xff]
        %vm137 = vcmask 171008
        %v138 = vsel %vm137, %v135, 0.0
        %139 = vadd.xlane.f32.xlu0 %v138
        %v140 = vpop.xlane.xlu0 %139
        %v141 = vsel %vm137, %v136, 0.0
        %142 = vadd.xlane.f32.xlu0 %v141
        %v143 = vpop.xlane.xlu0 %142
        %v144 = vrcp.pop 21.0
        %v145 = vmul.f32 %v140, %v144
        %v146 = vmul.f32 %v143, %v144
        %v147 = vsub.f32 %v135, %v145
        %v148 = vsub.f32 %v136, %v146
        %v149 = vmul.f32 %v147, %v147
        %v150 = vmul.f32 %v148, %v148
        %v151 = vsel %vm137, %v149, 0.0
        %152 = vadd.xlane.f32.xlu0 %v151
        %v153 = vpop.xlane.xlu0 %152
        %v154 = vsel %vm137, %v150, 0.0
        %155 = vadd.xlane.f32.xlu0 %v154
        %v156 = vpop.xlane.xlu0 %155
        %v157 = vmul.f32 %v153, %v144
        %v158 = vmul.f32 %v156, %v144
        %v159 = vadd.f32 %v157, 1e-05
        %v160 = vadd.f32 %v158, 1e-05
        %v161 = vrsqrt.pop %v159
        %v162 = vrsqrt.pop %v160
        %v163 = vmul.f32 %v147, %v161
        %v164 = vmul.f32 %v148, %v162
        %165 = vst.msk [vmem:[%s134] sm:$0xff] %vm137, %v163
        %166 = vst.msk [vmem:[%s134 + $0x8] sm:$0xff] %vm137, %v164
        %s167 = sand.u32 %s52, 1
        %s168 = scalar_lea.sflag [#allocation4], %s167
        %s169 = sand.u32 %s52, 1
        %s170 = smul.addr %s169, 16
        %s171 = scalar_lea.vmem [#allocation5], %s170
        // Predicated region
        $region29: #{tpu_custom_call.1} parent=23 // pred_check
          %p172 = pneg %p62
        $region30: #{tpu_custom_call.1} parent=23 // pred_check_branch
          %174 = sbr.rel (%p172) target = $region32
        $region31: #{tpu_custom_call.1} parent=23 // pred_region
          %s176 = ssub.s32 256, 256
          %177 = vsyncadd %s168, %s176
          %s178 = smul.addr %s18, 2
          %s179 = smul.addr %s178, 128
          %s180 = scalar_lea.hbm %s1, %s179
          %s181 = sshll.u32 %s171, 4
          %s182 = int_to_ptr.vmem [resolvable:$true] %s181
          %187 = dma.vmem_to_hbm [thread:$0]  %s182, 256, %s180, %s168, 128, 128, 8
        $region32: #{tpu_custom_call.1} parent=23 // pred_fallthru
          _
      $region24: #{tpu_custom_call.1} parent=5 // pred_fallthru
        _
      %p188 = scmp.le.s32.totalorder 2, %s13
      // Predicated region
      $region33: #{tpu_custom_call.1} parent=5 // pred_check
        %p189 = pneg %p188
      $region34: #{tpu_custom_call.1} parent=5 // pred_check_branch
        %191 = sbr.rel (%p189) target = $region36
      $region35: #{tpu_custom_call.1} parent=5 // pred_region
        %s192 = ssub.s32 %s13, 2
        // Predicated region
        $region37: #{tpu_custom_call.1} parent=35 // pred_check
          %p193 = pneg %p68
        $region38: #{tpu_custom_call.1} parent=35 // pred_check_branch
          %195 = sbr.rel (%p193) target = $region40
        $region39: #{tpu_custom_call.1} parent=35 // pred_region
          %s196 = sand.u32 %s53, 1
          %s197 = scalar_lea.sflag [#allocation4], %s196
          %s198 = sand.u32 %s53, 1
          %s199 = smul.addr %s198, 16
          %s200 = scalar_lea.vmem [#allocation5], %s199
          %201 = dma.done %s197, 256
        $region40: #{tpu_custom_call.1} parent=35 // pred_fallthru
          _
      $region36: #{tpu_custom_call.1} parent=5 // pred_fallthru
        _
    $region6: #{tpu_custom_call.1} parent=1 // loop_footer
      %s17 = sadd.s32 1, %s13
    $region7: #{tpu_custom_call.1} parent=1 // loop_footer_branch
      %12 = sbr.rel target = $region3
    $region8: #{tpu_custom_call.1} parent=1 // loop_exit
      _
    %202 = vsyncpa [#allocation3], 1
    %s203 = scalar_lea.sflag [#allocation3], 1
    %204 = vsyncpa %s203, 1
    %205 = vsyncpa [#allocation4], 1
    %s206 = scalar_lea.sflag [#allocation4], 1
    %207 = vsyncpa %s206, 1

</llo_original>
